<compile_context>
chip_gen: v7x
topology: tpu7x:2x2x1
jax: 0.10.0
libtpu: 0.0.40
codegen_flags: <defaults>
</compile_context>

<pallas_src>
import jax
import jax.numpy as jnp
from jax.experimental import pallas as pl
from jax.experimental.pallas import tpu as pltpu


def _round_up(a, m):
    return ((a + m - 1) // m) * m


def _mlp_kernel(x_ref, w1_ref, b1_ref, w2_ref, b2_ref, w3_ref, b3_ref, o_ref):
    # Cast the f32 batch tile to the weights' compute dtype (bf16 or f32) in-kernel,
    # right before the MXU matmul -> no separate out-of-kernel cast pass over x.
    x = x_ref[...].astype(w1_ref.dtype)
    # Layer 1: Linear + ReLU (MXU matmul, f32 accumulation; bias/ReLU in f32 on the VPU).
    h1 = jnp.dot(x, w1_ref[...], preferred_element_type=jnp.float32)
    h1 = jnp.maximum(h1 + b1_ref[...], 0.0)
    # Layer 2: Linear + ReLU.
    h2 = jnp.dot(h1.astype(w2_ref.dtype), w2_ref[...],
                 preferred_element_type=jnp.float32)
    h2 = jnp.maximum(h2 + b2_ref[...], 0.0)
    # Layer 3: logits. Output block is the unpadded (TB, output_dim) tile; the lane-masked
    # store is cheaper than writing 128 padded f32 columns plus a separate slice pass.
    out = jnp.dot(h2.astype(w3_ref.dtype), w3_ref[...],
                  preferred_element_type=jnp.float32)
    o_ref[...] = (out + b3_ref[...]).astype(o_ref.dtype)


def prepare_params(params, use_bf16=True):
    """One-time cast of matmul weights to the compute dtype (explicit opt-in).

    Biases are kept in f32 (bias-add / ReLU run in f32 on the VPU). Calling this once
    and reusing the result avoids re-casting w1/w2/w3 on every forward call.
    """
    if not use_bf16:
        return dict(params)
    p = dict(params)
    for k in ("w1", "w2", "w3"):
        p[k] = params[k].astype(jnp.bfloat16)
    return p


def pattern_classifier_forward(x, params, *, block_b=2048):
    """Fused 3-layer MLP forward, 1-D grid over the batch dimension.

    x: (B, input_dim) float32
    params: dict with w1 (D,H), b1 (1,H), w2 (H,H), b2 (1,H), w3 (H,O), b3 (1,O).
            Weights may be f32 (exact torch semantics) or bf16 (via prepare_params);
            the kernel casts x / activations to the weights' dtype before each matmul
            and accumulates in f32.
    block_b: max batch-tile size. Per-tile VMEM is tiny (~a few MiB at 2048 rows), so the
             tile is capped only so the grid keeps >= 2 steps (v7x megacore sharding).
    returns logits: (B, O) float32
    """
    w1, b1 = params["w1"], params["b1"]
    w2, b2 = params["w2"], params["b2"]
    w3, b3 = params["w3"], params["b3"]

    B, D = x.shape
    H = w1.shape[1]
    O = w3.shape[1]

    # Batch tile: multiple of 16 for bf16 (sublane packing) / 8 for f32; capped so the
    # grid has at least 2 steps for the "parallel" batch axis (both v7x TensorCores busy).
    sub = 16 if w1.dtype == jnp.bfloat16 else 8
    TB = max(sub, min(block_b, _round_up(pl.cdiv(B, 2), sub)))
    # No explicit batch padding: Pallas masks the ragged edge tile, and rows are
    # independent in this row-wise MLP, so garbage rows in the edge tile never leak.
    grid = (pl.cdiv(B, TB),)

    const = lambda i: (0, 0)  # weights/biases: same block every step -> VMEM-resident
    out = pl.pallas_call(
        _mlp_kernel,
        out_shape=jax.ShapeDtypeStruct((B, O), jnp.float32),
        grid=grid,
        in_specs=[
            pl.BlockSpec((TB, D), lambda i: (i, 0)),   # x: streamed batch tile (f32)
            pl.BlockSpec((D, H), const),               # w1
            pl.BlockSpec((1, H), const),               # b1 (f32)
            pl.BlockSpec((H, H), const),               # w2
            pl.BlockSpec((1, H), const),               # b2 (f32)
            pl.BlockSpec((H, O), const),               # w3 (unpadded: O == full dim)
            pl.BlockSpec((1, O), const),               # b3 (f32)
        ],
        out_specs=pl.BlockSpec((TB, O), lambda i: (i, 0)),  # unpadded logits tile
        compiler_params=pltpu.CompilerParams(
            dimension_semantics=("parallel",),
        ),
    )(x, w1, b1, w2, b2, w3, b3)
    return out


def init_params(key, input_dim, hidden_dim=128, output_dim=42):
    """Deterministic parameter init (Kaiming-uniform-ish like torch's Linear default)."""
    ks = jax.random.split(key, 6)

    def lin(kw, kb, fan_in, fan_out):
        bound = 1.0 / jnp.sqrt(fan_in)
        # stored as (in, out) so the kernel does x @ W
        w = jax.random.uniform(kw, (fan_in, fan_out), jnp.float32, -bound, bound)
        b = jax.random.uniform(kb, (1, fan_out), jnp.float32, -bound, bound)
        return w, b

    w1, b1 = lin(ks[0], ks[1], input_dim, hidden_dim)
    w2, b2 = lin(ks[2], ks[3], hidden_dim, hidden_dim)
    w3, b3 = lin(ks[4], ks[5], hidden_dim, output_dim)
    return {"w1": w1, "b1": b1, "w2": w2, "b2": b2, "w3": w3, "b3": b3}


def reference_forward(x, p):
    """Pure-JAX f32 reference matching the original torch PatternClassifier."""
    h1 = jnp.maximum(jnp.dot(x, p["w1"], preferred_element_type=jnp.float32) + p["b1"], 0.0)
    h2 = jnp.maximum(jnp.dot(h1, p["w2"], preferred_element_type=jnp.float32) + p["b2"], 0.0)
    return jnp.dot(h2, p["w3"], preferred_element_type=jnp.float32) + p["b3"]


if __name__ == "__main__":
    key = jax.random.PRNGKey(0)
    k_x, k_p = jax.random.split(key)

    # Small demo shapes; batch=100 is deliberately NOT a multiple of the tile so the
    # ragged edge-block masking path is exercised (grid has 2 steps either way).
    batch, input_dim, hidden_dim, output_dim = 100, 32, 128, 42
    x = jax.random.normal(k_x, (batch, input_dim), jnp.float32)
    params = init_params(k_p, input_dim, hidden_dim, output_dim)

    ref = reference_forward(x, params)

    # f32 path: matches the original (f32) PyTorch module semantics.
    out_f32 = jax.block_until_ready(pattern_classifier_forward(x, params))
    assert out_f32.shape == (batch, output_dim)
    assert jnp.allclose(out_f32, ref, atol=2e-3, rtol=2e-3), "f32 kernel mismatch vs reference"

    # bf16-matmul path (explicit opt-in via prepare_params; f32 accumulation inside).
    params_bf16 = prepare_params(params, use_bf16=True)
    out_bf16 = jax.block_until_ready(pattern_classifier_forward(x, params_bf16))
    assert out_bf16.shape == (batch, output_dim)
    assert jnp.allclose(out_bf16, ref, atol=5e-2, rtol=5e-2), "bf16 kernel mismatch vs reference"

    print("KERNEL_OK")
</pallas_src>

<mosaic_0001>
module attributes {stable_mosaic.version = 11 : i64} {
  func.func @_mlp_kernel(%arg0: i32, %arg1: memref<56x32xf32, #tpu.memory_space<vmem>>, %arg2: memref<32x128xf32, #tpu.memory_space<vmem>>, %arg3: memref<1x128xf32, #tpu.memory_space<vmem>>, %arg4: memref<128x128xf32, #tpu.memory_space<vmem>>, %arg5: memref<1x128xf32, #tpu.memory_space<vmem>>, %arg6: memref<128x42xf32, #tpu.memory_space<vmem>>, %arg7: memref<1x42xf32, #tpu.memory_space<vmem>>, %arg8: memref<56x42xf32, #tpu.memory_space<vmem>>) attributes {dimension_semantics = [#tpu.dimension_semantics<parallel>], iteration_bounds = array<i64: 2>, scalar_prefetch = 0 : i64, scratch_operands = 0 : i64, tpu.core_type = #tpu.core_type<tc>, window_params = [{transform_indices = @transform_0, window_bounds = array<i64: 56, 32>}, {pipeline_mode = #tpu.pipeline_mode<synchronous>, transform_indices = @transform_1, window_bounds = array<i64: 32, 128>}, {pipeline_mode = #tpu.pipeline_mode<synchronous>, transform_indices = @transform_2, window_bounds = array<i64: 1, 128>}, {pipeline_mode = #tpu.pipeline_mode<synchronous>, transform_indices = @transform_3, window_bounds = array<i64: 128, 128>}, {pipeline_mode = #tpu.pipeline_mode<synchronous>, transform_indices = @transform_4, window_bounds = array<i64: 1, 128>}, {pipeline_mode = #tpu.pipeline_mode<synchronous>, transform_indices = @transform_5, window_bounds = array<i64: 128, 42>}, {pipeline_mode = #tpu.pipeline_mode<synchronous>, transform_indices = @transform_6, window_bounds = array<i64: 1, 42>}, {transform_indices = @transform_7, window_bounds = array<i64: 56, 42>}]} {
    %c0 = arith.constant 0 : index
    %c0_0 = arith.constant 0 : index
    %0 = vector.load %arg1[%c0, %c0_0] : memref<56x32xf32, #tpu.memory_space<vmem>>, vector<56x32xf32>
    %c0_1 = arith.constant 0 : index
    %c0_2 = arith.constant 0 : index
    %1 = vector.load %arg2[%c0_1, %c0_2] : memref<32x128xf32, #tpu.memory_space<vmem>>, vector<32x128xf32>
    %cst = arith.constant dense<0.000000e+00> : vector<56x128xf32>
    %2 = tpu.matmul %0, %1, %cst {dimension_numbers = #tpu.dot_dimension_numbers<[1], [0], [0], [1], [0, 0, 1, 1], [], []>} : vector<56x32xf32>, vector<32x128xf32>, vector<56x128xf32> -> vector<56x128xf32>
    %c0_3 = arith.constant 0 : index
    %c0_4 = arith.constant 0 : index
    %3 = vector.load %arg3[%c0_3, %c0_4] : memref<1x128xf32, #tpu.memory_space<vmem>>, vector<1x128xf32>
    %4 = vector.broadcast %3 : vector<1x128xf32> to vector<56x128xf32>
    %5 = arith.addf %2, %4 : vector<56x128xf32>
    %cst_5 = arith.constant 0.000000e+00 : f32
    %6 = vector.broadcast %cst_5 : f32 to vector<56x128xf32>
    %7 = arith.maximumf %5, %6 : vector<56x128xf32>
    %c0_6 = arith.constant 0 : index
    %c0_7 = arith.constant 0 : index
    %8 = vector.load %arg4[%c0_6, %c0_7] : memref<128x128xf32, #tpu.memory_space<vmem>>, vector<128x128xf32>
    %cst_8 = arith.constant dense<0.000000e+00> : vector<56x128xf32>
    %9 = tpu.matmul %7, %8, %cst_8 {dimension_numbers = #tpu.dot_dimension_numbers<[1], [0], [0], [1], [0, 0, 1, 1], [], []>} : vector<56x128xf32>, vector<128x128xf32>, vector<56x128xf32> -> vector<56x128xf32>
    %c0_9 = arith.constant 0 : index
    %c0_10 = arith.constant 0 : index
    %10 = vector.load %arg5[%c0_9, %c0_10] : memref<1x128xf32, #tpu.memory_space<vmem>>, vector<1x128xf32>
    %11 = vector.broadcast %10 : vector<1x128xf32> to vector<56x128xf32>
    %12 = arith.addf %9, %11 : vector<56x128xf32>
    %cst_11 = arith.constant 0.000000e+00 : f32
    %13 = vector.broadcast %cst_11 : f32 to vector<56x128xf32>
    %14 = arith.maximumf %12, %13 : vector<56x128xf32>
    %c0_12 = arith.constant 0 : index
    %c0_13 = arith.constant 0 : index
    %15 = vector.load %arg6[%c0_12, %c0_13] : memref<128x42xf32, #tpu.memory_space<vmem>>, vector<128x42xf32>
    %cst_14 = arith.constant dense<0.000000e+00> : vector<56x42xf32>
    %16 = tpu.matmul %14, %15, %cst_14 {dimension_numbers = #tpu.dot_dimension_numbers<[1], [0], [0], [1], [0, 0, 1, 1], [], []>} : vector<56x128xf32>, vector<128x42xf32>, vector<56x42xf32> -> vector<56x42xf32>
    %c0_15 = arith.constant 0 : index
    %c0_16 = arith.constant 0 : index
    %17 = vector.load %arg7[%c0_15, %c0_16] : memref<1x42xf32, #tpu.memory_space<vmem>>, vector<1x42xf32>
    %18 = vector.broadcast %17 : vector<1x42xf32> to vector<56x42xf32>
    %19 = arith.addf %16, %18 : vector<56x42xf32>
    %c0_17 = arith.constant 0 : index
    %c0_18 = arith.constant 0 : index
    %20 = vector.load %arg8[%c0_17, %c0_18] : memref<56x42xf32, #tpu.memory_space<vmem>>, vector<56x42xf32>
    tpu.vector_store %arg8[%c0_17, %c0_18], %19 {strides = array<i32>} : memref<56x42xf32, #tpu.memory_space<vmem>>, vector<56x42xf32>,
    return
  }
  func.func @transform_0(%arg0: i32) -> (i32, i32) {
    %c0_i32 = arith.constant 0 : i32
    %c0_i32_0 = arith.constant 0 : i32
    return %arg0, %c0_i32 : i32, i32
  }
  func.func @transform_1(%arg0: i32) -> (i32, i32) {
    %c0_i32 = arith.constant 0 : i32
    %c0_i32_0 = arith.constant 0 : i32
    %c0_i32_1 = arith.constant 0 : i32
    return %c0_i32, %c0_i32_0 : i32, i32
  }
  func.func @transform_2(%arg0: i32) -> (i32, i32) {
    %c0_i32 = arith.constant 0 : i32
    %c0_i32_0 = arith.constant 0 : i32
    %c0_i32_1 = arith.constant 0 : i32
    return %c0_i32, %c0_i32_0 : i32, i32
  }
  func.func @transform_3(%arg0: i32) -> (i32, i32) {
    %c0_i32 = arith.constant 0 : i32
    %c0_i32_0 = arith.constant 0 : i32
    %c0_i32_1 = arith.constant 0 : i32
    return %c0_i32, %c0_i32_0 : i32, i32
  }
  func.func @transform_4(%arg0: i32) -> (i32, i32) {
    %c0_i32 = arith.constant 0 : i32
    %c0_i32_0 = arith.constant 0 : i32
    %c0_i32_1 = arith.constant 0 : i32
    return %c0_i32, %c0_i32_0 : i32, i32
  }
  func.func @transform_5(%arg0: i32) -> (i32, i32) {
    %c0_i32 = arith.constant 0 : i32
    %c0_i32_0 = arith.constant 0 : i32
    %c0_i32_1 = arith.constant 0 : i32
    return %c0_i32, %c0_i32_0 : i32, i32
  }
  func.func @transform_6(%arg0: i32) -> (i32, i32) {
    %c0_i32 = arith.constant 0 : i32
    %c0_i32_0 = arith.constant 0 : i32
    %c0_i32_1 = arith.constant 0 : i32
    return %c0_i32, %c0_i32_0 : i32, i32
  }
  func.func @transform_7(%arg0: i32) -> (i32, i32) {
    %c0_i32 = arith.constant 0 : i32
    %c0_i32_0 = arith.constant 0 : i32
    return %arg0, %c0_i32 : i32, i32
  }
}

</mosaic_0001>

<llo_original>
// kernel: tpu_custom_call.1
$region0: #{tpu_custom_call.1}
  #allocation0 [shape = 'u32[]', space=smem, size = 0x4, offset = 0x4, fixed_abs, tag = 'smem constant byte address 0x4 - core index']
  #allocation1 [shape = 'u32[144,128]{1,0:T(1,128)}', space=vmem, size = 0x12000, scoped, tag = 'internal scratch']
  %s0 = inlined_call_operand.vmem [shape: f32[100,32], index: 0, kind: input, shape index: {}]
  %s1 = inlined_call_operand.vmem [shape: f32[32,128], index: 1, kind: input, shape index: {}]
  %s2 = inlined_call_operand.vmem [shape: f32[1,128], index: 2, kind: input, shape index: {}]
  %s3 = inlined_call_operand.vmem [shape: f32[128,128], index: 3, kind: input, shape index: {}]
  %s4 = inlined_call_operand.vmem [shape: f32[1,128], index: 4, kind: input, shape index: {}]
  %s5 = inlined_call_operand.vmem [shape: f32[128,42], index: 5, kind: input, shape index: {}]
  %s6 = inlined_call_operand.vmem [shape: f32[1,42], index: 6, kind: input, shape index: {}]
  %s7 = inlined_call_operand.vmem [shape: f32[100,42], index: 7, kind: output, shape index: {}]
  %s8 = sld [smem:[#allocation0]]
  $region109: #{tpu_custom_call.1} parent=0
    _
  %s10 = ssub.s32 1, %s8
  %s11 = scalar_select 0, %s10, %s8
  $region1: #{tpu_custom_call.1} parent=0
    #allocation2 [shape = 'u8[57344]{0}', space=vmem, size = 0xe000, scoped, tag = 'output window, operand 0']
    loop: start=0, step=1, limit=4
    $region2: #{tpu_custom_call.1} parent=1 // loop_pre_header
      _
    $region3: #{tpu_custom_call.1} parent=1 // loop_header
      %s13 = sphi 0, %s17
      %p14 = scmp.ge.s32.totalorder %s13, 4
      %s23 = sphi 0, %s25
      %s26 = sphi 0, %s23
      %s27 = sphi 0, %s26
      %s43 = sphi 0, %s27
      %s47 = sphi 0, %s47
      %s49 = sphi 0, %s47
      %s50 = sphi 0, %s49
      %s64 = sphi 0, %s50
      %s68 = sphi 0, %s68
      %s70 = sphi 0, %s68
      %s71 = sphi 0, %s70
      %s85 = sphi 0, %s71
      %s89 = sphi 0, %s89
      %s91 = sphi 0, %s89
      %s92 = sphi 0, %s91
      %s106 = sphi 0, %s92
      %s110 = sphi 0, %s110
      %s112 = sphi 0, %s110
      %s113 = sphi 0, %s112
      %s127 = sphi 0, %s113
      %s131 = sphi 0, %s131
      %s133 = sphi 0, %s131
      %s134 = sphi 0, %s133
      %s148 = sphi 0, %s134
      %s152 = sphi 0, %s152
      %s154 = sphi 0, %s152
      %s155 = sphi 0, %s154
      %s169 = sphi 0, %s155
      %s175 = sphi 0, %s177
      %s178 = sphi 0, %s175
      %s179 = sphi 0, %s178
      %s195 = sphi 0, %s179
    $region4: #{tpu_custom_call.1} parent=1 // loop_header_branch
      %16 = sbr.rel (%p14) target = $region8
    $region5: #{tpu_custom_call.1} parent=1 // loop_body
      %s18 = ssub.s32 %s13, 1
      %s19 = ssub.s32 %s13, 2
      %s20 = sadd.s32 %s13, 1
      %s21 = ssub.s32 %s13, %s20
      %p22 = scmp.eq.s32.totalorder %s21, 0
      %s24 = sadd.s32 %s23, 1
      %s25 = scalar_select %p22, %s23, %s24
      %p28 = pneg %p22
      %p29 = scmp.eq.s32.totalorder %s13, 1
      %p30 = por %p28, %p29
      %p31 = scmp.ne.s32.totalorder %s23, %s26
      %p32 = scmp.eq.s32.totalorder %s13, 0
      %p33 = por %p31, %p32
      %p34 = scmp.ne.s32.totalorder %s23, %s26
      %p35 = scmp.eq.s32.totalorder %s18, 1
      %p36 = por %p34, %p35
      %p37 = scmp.ne.s32.totalorder %s26, %s27
      %p38 = scmp.eq.s32.totalorder %s18, 0
      %p39 = por %p37, %p38
      %p40 = scmp.ne.s32.totalorder %s26, %s27
      %p41 = scmp.eq.s32.totalorder %s19, 1
      %p42 = por %p40, %p41
      %p44 = scmp.ne.s32.totalorder %s27, %s43
      %p45 = scmp.eq.s32.totalorder %s19, 0
      %p46 = por %p44, %p45
      %s48 = sadd.s32 %s47, 1
      %p51 = scmp.eq.s32.totalorder %s13, 1
      %p52 = scmp.ne.s32.totalorder %s47, %s49
      %p53 = scmp.eq.s32.totalorder %s13, 0
      %p54 = por %p52, %p53
      %p55 = scmp.ne.s32.totalorder %s47, %s49
      %p56 = scmp.eq.s32.totalorder %s18, 1
      %p57 = por %p55, %p56
      %p58 = scmp.ne.s32.totalorder %s49, %s50
      %p59 = scmp.eq.s32.totalorder %s18, 0
      %p60 = por %p58, %p59
      %p61 = scmp.ne.s32.totalorder %s49, %s50
      %p62 = scmp.eq.s32.totalorder %s19, 1
      %p63 = por %p61, %p62
      %p65 = scmp.ne.s32.totalorder %s50, %s64
      %p66 = scmp.eq.s32.totalorder %s19, 0
      %p67 = por %p65, %p66
      %s69 = sadd.s32 %s68, 1
      %p72 = scmp.eq.s32.totalorder %s13, 1
      %p73 = scmp.ne.s32.totalorder %s68, %s70
      %p74 = scmp.eq.s32.totalorder %s13, 0
      %p75 = por %p73, %p74
      %p76 = scmp.ne.s32.totalorder %s68, %s70
      %p77 = scmp.eq.s32.totalorder %s18, 1
      %p78 = por %p76, %p77
      %p79 = scmp.ne.s32.totalorder %s70, %s71
      %p80 = scmp.eq.s32.totalorder %s18, 0
      %p81 = por %p79, %p80
      %p82 = scmp.ne.s32.totalorder %s70, %s71
      %p83 = scmp.eq.s32.totalorder %s19, 1
      %p84 = por %p82, %p83
      %p86 = scmp.ne.s32.totalorder %s71, %s85
      %p87 = scmp.eq.s32.totalorder %s19, 0
      %p88 = por %p86, %p87
      %s90 = sadd.s32 %s89, 1
      %p93 = scmp.eq.s32.totalorder %s13, 1
      %p94 = scmp.ne.s32.totalorder %s89, %s91
      %p95 = scmp.eq.s32.totalorder %s13, 0
      %p96 = por %p94, %p95
      %p97 = scmp.ne.s32.totalorder %s89, %s91
      %p98 = scmp.eq.s32.totalorder %s18, 1
      %p99 = por %p97, %p98
      %p100 = scmp.ne.s32.totalorder %s91, %s92
      %p101 = scmp.eq.s32.totalorder %s18, 0
      %p102 = por %p100, %p101
      %p103 = scmp.ne.s32.totalorder %s91, %s92
      %p104 = scmp.eq.s32.totalorder %s19, 1
      %p105 = por %p103, %p104
      %p107 = scmp.ne.s32.totalorder %s92, %s106
      %p108 = scmp.eq.s32.totalorder %s19, 0
      %p109 = por %p107, %p108
      %s111 = sadd.s32 %s110, 1
      %p114 = scmp.eq.s32.totalorder %s13, 1
      %p115 = scmp.ne.s32.totalorder %s110, %s112
      %p116 = scmp.eq.s32.totalorder %s13, 0
      %p117 = por %p115, %p116
      %p118 = scmp.ne.s32.totalorder %s110, %s112
      %p119 = scmp.eq.s32.totalorder %s18, 1
      %p120 = por %p118, %p119
      %p121 = scmp.ne.s32.totalorder %s112, %s113
      %p122 = scmp.eq.s32.totalorder %s18, 0
      %p123 = por %p121, %p122
      %p124 = scmp.ne.s32.totalorder %s112, %s113
      %p125 = scmp.eq.s32.totalorder %s19, 1
      %p126 = por %p124, %p125
      %p128 = scmp.ne.s32.totalorder %s113, %s127
      %p129 = scmp.eq.s32.totalorder %s19, 0
      %p130 = por %p128, %p129
      %s132 = sadd.s32 %s131, 1
      %p135 = scmp.eq.s32.totalorder %s13, 1
      %p136 = scmp.ne.s32.totalorder %s131, %s133
      %p137 = scmp.eq.s32.totalorder %s13, 0
      %p138 = por %p136, %p137
      %p139 = scmp.ne.s32.totalorder %s131, %s133
      %p140 = scmp.eq.s32.totalorder %s18, 1
      %p141 = por %p139, %p140
      %p142 = scmp.ne.s32.totalorder %s133, %s134
      %p143 = scmp.eq.s32.totalorder %s18, 0
      %p144 = por %p142, %p143
      %p145 = scmp.ne.s32.totalorder %s133, %s134
      %p146 = scmp.eq.s32.totalorder %s19, 1
      %p147 = por %p145, %p146
      %p149 = scmp.ne.s32.totalorder %s134, %s148
      %p150 = scmp.eq.s32.totalorder %s19, 0
      %p151 = por %p149, %p150
      %s153 = sadd.s32 %s152, 1
      %p156 = scmp.eq.s32.totalorder %s13, 1
      %p157 = scmp.ne.s32.totalorder %s152, %s154
      %p158 = scmp.eq.s32.totalorder %s13, 0
      %p159 = por %p157, %p158
      %p160 = scmp.ne.s32.totalorder %s152, %s154
      %p161 = scmp.eq.s32.totalorder %s18, 1
      %p162 = por %p160, %p161
      %p163 = scmp.ne.s32.totalorder %s154, %s155
      %p164 = scmp.eq.s32.totalorder %s18, 0
      %p165 = por %p163, %p164
      %p166 = scmp.ne.s32.totalorder %s154, %s155
      %p167 = scmp.eq.s32.totalorder %s19, 1
      %p168 = por %p166, %p167
      %p170 = scmp.ne.s32.totalorder %s155, %s169
      %p171 = scmp.eq.s32.totalorder %s19, 0
      %p172 = por %p170, %p171
      %s173 = ssub.s32 %s13, %s20
      %p174 = scmp.eq.s32.totalorder %s173, 0
      %s176 = sadd.s32 %s175, 1
      %s177 = scalar_select %p174, %s175, %s176
      %p180 = pneg %p174
      %p181 = scmp.eq.s32.totalorder %s13, 1
      %p182 = por %p180, %p181
      %p183 = scmp.ne.s32.totalorder %s175, %s178
      %p184 = scmp.eq.s32.totalorder %s13, 0
      %p185 = por %p183, %p184
      %p186 = scmp.ne.s32.totalorder %s175, %s178
      %p187 = scmp.eq.s32.totalorder %s18, 1
      %p188 = por %p186, %p187
      %p189 = scmp.ne.s32.totalorder %s178, %s179
      %p190 = scmp.eq.s32.totalorder %s18, 0
      %p191 = por %p189, %p190
      %p192 = scmp.ne.s32.totalorder %s178, %s179
      %p193 = scmp.eq.s32.totalorder %s19, 1
      %p194 = por %p192, %p193
      %p196 = scmp.ne.s32.totalorder %s179, %s195
      %p197 = scmp.eq.s32.totalorder %s19, 0
      %p198 = por %p196, %p197
      %p199 = scmp.le.s32.totalorder 1, %s13
      %p200 = scmp.lt.s32.totalorder %s13, 3
      %p201 = pnand %p199, %p200
      %p202 = pneg %p201
      // Predicated region
      $region9: #{tpu_custom_call.1} parent=5 // pred_check
        _
      $region10: #{tpu_custom_call.1} parent=5 // pred_check_branch
        %204 = sbr.rel (%p201) target = $region12
      $region11: #{tpu_custom_call.1} parent=5 // pred_region
        %s205 = ssub.s32 %s13, 1
        // Predicated region
        $region13: #{tpu_custom_call.1} parent=11 // pred_check
          %p206 = pneg %p60
        $region14: #{tpu_custom_call.1} parent=11 // pred_check_branch
          %208 = sbr.rel (%p206) target = $region16
        $region15: #{tpu_custom_call.1} parent=11 // pred_region
          _
        $region16: #{tpu_custom_call.1} parent=11 // pred_fallthru
          _
        // Predicated region
        $region17: #{tpu_custom_call.1} parent=11 // pred_check
          %p209 = pneg %p81
        $region18: #{tpu_custom_call.1} parent=11 // pred_check_branch
          %211 = sbr.rel (%p209) target = $region20
        $region19: #{tpu_custom_call.1} parent=11 // pred_region
          _
        $region20: #{tpu_custom_call.1} parent=11 // pred_fallthru
          _
        // Predicated region
        $region21: #{tpu_custom_call.1} parent=11 // pred_check
          %p212 = pneg %p102
        $region22: #{tpu_custom_call.1} parent=11 // pred_check_branch
          %214 = sbr.rel (%p212) target = $region24
        $region23: #{tpu_custom_call.1} parent=11 // pred_region
          _
        $region24: #{tpu_custom_call.1} parent=11 // pred_fallthru
          _
        // Predicated region
        $region25: #{tpu_custom_call.1} parent=11 // pred_check
          %p215 = pneg %p123
        $region26: #{tpu_custom_call.1} parent=11 // pred_check_branch
          %217 = sbr.rel (%p215) target = $region28
        $region27: #{tpu_custom_call.1} parent=11 // pred_region
          _
        $region28: #{tpu_custom_call.1} parent=11 // pred_fallthru
          _
        // Predicated region
        $region29: #{tpu_custom_call.1} parent=11 // pred_check
          %p218 = pneg %p144
        $region30: #{tpu_custom_call.1} parent=11 // pred_check_branch
          %220 = sbr.rel (%p218) target = $region32
        $region31: #{tpu_custom_call.1} parent=11 // pred_region
          _
        $region32: #{tpu_custom_call.1} parent=11 // pred_fallthru
          _
        // Predicated region
        $region33: #{tpu_custom_call.1} parent=11 // pred_check
          %p221 = pneg %p165
        $region34: #{tpu_custom_call.1} parent=11 // pred_check_branch
          %223 = sbr.rel (%p221) target = $region36
        $region35: #{tpu_custom_call.1} parent=11 // pred_region
          _
        $region36: #{tpu_custom_call.1} parent=11 // pred_fallthru
          _
      $region12: #{tpu_custom_call.1} parent=5 // pred_fallthru
        _
      %p224 = scmp.lt.s32.totalorder %s13, 2
      // Predicated region
      $region37: #{tpu_custom_call.1} parent=5 // pred_check
        %p225 = pneg %p224
      $region38: #{tpu_custom_call.1} parent=5 // pred_check_branch
        %227 = sbr.rel (%p225) target = $region40
      $region39: #{tpu_custom_call.1} parent=5 // pred_region
        // Predicated region
        $region41: #{tpu_custom_call.1} parent=39 // pred_check
          %p228 = pneg %p33
        $region42: #{tpu_custom_call.1} parent=39 // pred_check_branch
          %230 = sbr.rel (%p228) target = $region44
        $region43: #{tpu_custom_call.1} parent=39 // pred_region
          %s231 = smul.u32 7, %s13
          %s232 = ssub.s32 13, %s231
          %p233 = scmp.lt.s32.totalorder %s232, 7
          %s234 = scalar_select %p233, %s232, 7
          %s235 = smul.u32 128, %s234
          %p236 = scmp.lt.s32.totalorder %s231, 12
          %s237 = scalar_select %p236, %s231, 12
          %s238 = smul.addr %s237, 8
          %s239 = scalar_lea.vmem %s0, %s238
          %s240 = smul.u32 7, %s13
          %s241 = ssub.s32 13, %s240
          %p242 = scmp.lt.s32.totalorder %s241, 7
          %s243 = scalar_select %p242, %s241, 7
          %s244 = smul.u32 128, %s243
        $region44: #{tpu_custom_call.1} parent=39 // pred_fallthru
          _
      $region40: #{tpu_custom_call.1} parent=5 // pred_fallthru
        _
      %p245 = scmp.le.s32.totalorder 1, %s13
      %p246 = scmp.lt.s32.totalorder %s13, 3
      %p247 = pnand %p245, %p246
      %p248 = pneg %p247
      // Predicated region
      $region45: #{tpu_custom_call.1} parent=5 // pred_check
        _
      $region46: #{tpu_custom_call.1} parent=5 // pred_check_branch
        %250 = sbr.rel (%p247) target = $region48
      $region47: #{tpu_custom_call.1} parent=5 // pred_region
        %s251 = ssub.s32 %s13, 1
        %s252 = smul.u32 7, %s18
        %s253 = ssub.s32 13, %s252
        %p254 = scmp.lt.s32.totalorder %s253, 7
        %s255 = scalar_select %p254, %s253, 7
        %s256 = smul.u32 128, %s255
        %p257 = scmp.lt.s32.totalorder %s252, 12
        %s258 = scalar_select %p257, %s252, 12
        %s259 = smul.addr %s258, 8
        %s260 = scalar_lea.vmem %s0, %s259
        %p261 = pneg %p39
        %p262 = pneg %p36
        %p263 = pneg %p60
        %p264 = pneg %p57
        %p265 = pneg %p81
        %p266 = pneg %p78
        %p267 = pneg %p102
        %p268 = pneg %p99
        %p269 = pneg %p123
        %p270 = pneg %p120
        %p271 = pneg %p144
        %p272 = pneg %p141
        %p273 = pneg %p165
        %p274 = pneg %p162
        %p275 = pneg %p191
        %p276 = pneg %p188
        %s277 = sand.u32 %s178, 1
        %s278 = sand.u32 %s178, 1
        %s279 = smul.addr %s278, 56
        %s280 = scalar_lea.vmem [#allocation2], %s279
        %s281 = smul.u32 7, %s18
        %s282 = ssub.s32 13, %s281
        %p283 = scmp.lt.s32.totalorder %s282, 7
        %s284 = scalar_select %p283, %s282, 7
        %s285 = smul.u32 128, %s284
        %p286 = scmp.lt.s32.totalorder %s281, 12
        %s287 = scalar_select %p286, %s281, 12
        %s288 = smul.addr %s287, 8
        %s289 = scalar_lea.vmem %s0, %s288
        %s290 = smul.u32 7, %s18
        %s291 = ssub.s32 13, %s290
        %p292 = scmp.lt.s32.totalorder %s291, 7
        %s293 = scalar_select %p292, %s291, 7
        %s294 = smul.u32 128, %s293
        %s295 = smul.u32 7, %s18
        %s296 = ssub.s32 13, %s295
        %p297 = scmp.lt.s32.totalorder %s296, 7
        %s298 = scalar_select %p297, %s296, 7
        %s299 = smul.u32 128, %s298
        %v300 = vld [vmem:[%s289] sm:$0xff]
        %v301 = vld [vmem:[%s289 + $0x8] sm:$0xff]
        %v302 = vld [vmem:[%s289 + $0x10] sm:$0xff]
        %v303 = vld [vmem:[%s289 + $0x18] sm:$0xff]
        %v304 = vld [vmem:[%s289 + $0x20] sm:$0xff]
        %v305 = vld [vmem:[%s289 + $0x28] sm:$0xff]
        %v306 = vld [vmem:[%s289 + $0x30] sm:$0xff]
        %v307 = vld [vmem:[%s1] sm:$0xff]
        %v308 = vld [vmem:[%s1 + $0x8] sm:$0xff]
        %v309 = vld [vmem:[%s1 + $0x10] sm:$0xff]
        %v310 = vld [vmem:[%s1 + $0x18] sm:$0xff]
        %v311 = vld [vmem:[%s2] sm:$0x1]
        %v313 = vlaneseq
        %v314 = vshrl.u32 %v313, 7
        %v315 = vsub.s32 0, %v314
        %v316 = vrot.slane %v311, %v315
        %vm318 = vcmask 261120
        %v320 = vsel %vm318, %v300, 0
        %v323 = vsel %vm318, %v301, 0
        %v326 = vsel %vm318, %v302, 0
        %v329 = vsel %vm318, %v303, 0
        %v332 = vsel %vm318, %v304, 0
        %v335 = vsel %vm318, %v305, 0
        %v338 = vsel %vm318, %v306, 0
        %340 = vmatprep.subr.mxu0 0.0
        %341 = vmatpush1.msra.mxu0 %v307
        %342 = vmatprep.subr.mxu0 0.0
        %343 = vmatpush1.msra.mxu0 %v308
        %344 = vmatprep.subr.mxu0 0.0
        %345 = vmatpush1.msra.mxu0 %v309
        %346 = vmatprep.subr.mxu0 0.0
        %347 = vmatpush1.msra.mxu0 %v310
        %348 = vmatprep.subr.mxu0 0.0
        %349 = vmatpush1.msra.mxu0 0.0
        %350 = vmatprep.subr.mxu0 0.0
        %351 = vmatpush1.msra.mxu0 0.0
        %352 = vmatprep.subr.mxu0 0.0
        %353 = vmatpush1.msra.mxu0 0.0
        %354 = vmatprep.subr.mxu0 0.0
        %355 = vmatpush1.msra.mxu0 0.0
        %356 = vmatprep.subr.mxu0 0.0
        %357 = vmatpush1.msra.mxu0 0.0
        %358 = vmatprep.subr.mxu0 0.0
        %359 = vmatpush1.msra.mxu0 0.0
        %360 = vmatprep.subr.mxu0 0.0
        %361 = vmatpush1.msra.mxu0 0.0
        %362 = vmatprep.subr.mxu0 0.0
        %363 = vmatpush1.msra.mxu0 0.0
        %364 = vmatprep.subr.mxu0 0.0
        %365 = vmatpush1.msra.mxu0 0.0
        %366 = vmatprep.subr.mxu0 0.0
        %367 = vmatpush1.msra.mxu0 0.0
        %368 = vmatprep.subr.mxu0 0.0
        %369 = vmatpush1.msra.mxu0 0.0
        %370 = vmatprep.subr.mxu0 0.0
        %371 = vmatpush1.msra.mxu0 0.0
        %372 = vmatprep.subr.mxu0 0.0
        %373 = vmatpush1.msra.mxu0 0.0
        %374 = vmatprep.subr.mxu0 0.0
        %375 = vmatpush1.msra.mxu0 0.0
        %376 = vmatprep.subr.mxu0 0.0
        %377 = vmatpush1.msra.mxu0 0.0
        %378 = vmatprep.subr.mxu0 0.0
        %379 = vmatpush1.msra.mxu0 0.0
        %380 = vmatprep.subr.mxu0 0.0
        %381 = vmatpush1.msra.mxu0 0.0
        %382 = vmatprep.subr.mxu0 0.0
        %383 = vmatpush1.msra.mxu0 0.0
        %384 = vmatprep.subr.mxu0 0.0
        %385 = vmatpush1.msra.mxu0 0.0
        %386 = vmatprep.subr.mxu0 0.0
        %387 = vmatpush1.msra.mxu0 0.0
        %388 = vmatprep.subr.mxu0 0.0
        %389 = vmatpush1.msra.mxu0 0.0
        %390 = vmatprep.subr.mxu0 0.0
        %391 = vmatpush1.msra.mxu0 0.0
        %392 = vmatprep.subr.mxu0 0.0
        %393 = vmatpush1.msra.mxu0 0.0
        %394 = vmatprep.subr.mxu0 0.0
        %395 = vmatpush1.msra.mxu0 0.0
        %396 = vmatprep.subr.mxu0 0.0
        %397 = vmatpush1.msra.mxu0 0.0
        %398 = vmatprep.subr.mxu0 0.0
        %399 = vmatpush1.msra.mxu0 0.0
        %400 = vmatprep.subr.mxu0 0.0
        %401 = vmatpush1.msra.mxu0 0.0
        %402 = vmatprep.subr.mxu0 0.0
        %403 = vmatpush1.msra.mxu0 0.0
        %404 = vmatprep.mubr.f32.mxu0 0.0
        %405 = vmatmul.mubr.f32.gmra.mrb[0].mxu0 %v320
        %v406 = vpop.f32.mrb[0].mxu0
        %v407 = vadd.f32 %v316, %v406
        %v408 = vpop.f32.mrb[0].mxu0
        %409 = vmatprep.mubr.f32.mxu0 0.0
        %410 = vmatmul.mubr.f32.gmra.mrb[0].mxu0 %v323
        %v411 = vpop.f32.mrb[0].mxu0
        %v412 = vadd.f32 %v316, %v411
        %v413 = vpop.f32.mrb[0].mxu0
        %414 = vmatprep.mubr.f32.mxu0 0.0
        %415 = vmatmul.mubr.f32.gmra.mrb[0].mxu0 %v326
        %v416 = vpop.f32.mrb[0].mxu0
        %v417 = vadd.f32 %v316, %v416
        %v418 = vpop.f32.mrb[0].mxu0
        %419 = vmatprep.mubr.f32.mxu0 0.0
        %420 = vmatmul.mubr.f32.gmra.mrb[0].mxu0 %v329
        %v421 = vpop.f32.mrb[0].mxu0
        %v422 = vadd.f32 %v316, %v421
        %v423 = vpop.f32.mrb[0].mxu0
        %424 = vmatprep.mubr.f32.mxu0 0.0
        %425 = vmatmul.mubr.f32.gmra.mrb[0].mxu0 %v332
        %v426 = vpop.f32.mrb[0].mxu0
        %v427 = vadd.f32 %v316, %v426
        %v428 = vpop.f32.mrb[0].mxu0
        %429 = vmatprep.mubr.f32.mxu0 0.0
        %430 = vmatmul.mubr.f32.gmra.mrb[0].mxu0 %v335
        %v431 = vpop.f32.mrb[0].mxu0
        %v432 = vadd.f32 %v316, %v431
        %v433 = vpop.f32.mrb[0].mxu0
        %434 = vmatprep.mubr.f32.mxu0 0.0
        %435 = vmatmul.mubr.f32.gmra.mrb[0].mxu0 %v338
        %v436 = vpop.f32.mrb[0].mxu0
        %v437 = vadd.f32 %v316, %v436
        %v438 = vpop.f32.mrb[0].mxu0
        %439 = vdwg.mxu0
        %v440 = vmax.f32 %v407, 0.0
        %v441 = vmax.f32 %v412, 0.0
        %v442 = vmax.f32 %v417, 0.0
        %v443 = vmax.f32 %v422, 0.0
        %v444 = vmax.f32 %v427, 0.0
        %v445 = vmax.f32 %v432, 0.0
        %v446 = vmax.f32 %v437, 0.0
        %v447 = vld [vmem:[%s3] sm:$0xff]
        %v448 = vld [vmem:[%s3 + $0x8] sm:$0xff]
        %v449 = vld [vmem:[%s3 + $0x10] sm:$0xff]
        %v450 = vld [vmem:[%s3 + $0x18] sm:$0xff]
        %v451 = vld [vmem:[%s3 + $0x20] sm:$0xff]
        %v452 = vld [vmem:[%s3 + $0x28] sm:$0xff]
        %v453 = vld [vmem:[%s3 + $0x30] sm:$0xff]
        %v454 = vld [vmem:[%s3 + $0x38] sm:$0xff]
        %v455 = vld [vmem:[%s3 + $0x40] sm:$0xff]
        %v456 = vld [vmem:[%s3 + $0x48] sm:$0xff]
        %v457 = vld [vmem:[%s3 + $0x50] sm:$0xff]
        %v458 = vld [vmem:[%s3 + $0x58] sm:$0xff]
        %v459 = vld [vmem:[%s3 + $0x60] sm:$0xff]
        %v460 = vld [vmem:[%s3 + $0x68] sm:$0xff]
        %v461 = vld [vmem:[%s3 + $0x70] sm:$0xff]
        %v462 = vld [vmem:[%s3 + $0x78] sm:$0xff]
        %v463 = vld [vmem:[%s4] sm:$0x1]
        %v465 = vlaneseq
        %v466 = vshrl.u32 %v465, 7
        %v467 = vsub.s32 0, %v466
        %v468 = vrot.slane %v463, %v467
        %470 = vmatprep.subr.mxu0 0.0
        %471 = vmatpush1.msra.mxu0 %v447
        %472 = vmatprep.subr.mxu0 0.0
        %473 = vmatpush1.msra.mxu0 %v448
        %474 = vmatprep.subr.mxu0 0.0
        %475 = vmatpush1.msra.mxu0 %v449
        %476 = vmatprep.subr.mxu0 0.0
        %477 = vmatpush1.msra.mxu0 %v450
        %478 = vmatprep.subr.mxu0 0.0
        %479 = vmatpush1.msra.mxu0 %v451
        %480 = vmatprep.subr.mxu0 0.0
        %481 = vmatpush1.msra.mxu0 %v452
        %482 = vmatprep.subr.mxu0 0.0
        %483 = vmatpush1.msra.mxu0 %v453
        %484 = vmatprep.subr.mxu0 0.0
        %485 = vmatpush1.msra.mxu0 %v454
        %486 = vmatprep.subr.mxu0 0.0
        %487 = vmatpush1.msra.mxu0 %v455
        %488 = vmatprep.subr.mxu0 0.0
        %489 = vmatpush1.msra.mxu0 %v456
        %490 = vmatprep.subr.mxu0 0.0
        %491 = vmatpush1.msra.mxu0 %v457
        %492 = vmatprep.subr.mxu0 0.0
        %493 = vmatpush1.msra.mxu0 %v458
        %494 = vmatprep.subr.mxu0 0.0
        %495 = vmatpush1.msra.mxu0 %v459
        %496 = vmatprep.subr.mxu0 0.0
        %497 = vmatpush1.msra.mxu0 %v460
        %498 = vmatprep.subr.mxu0 0.0
        %499 = vmatpush1.msra.mxu0 %v461
        %500 = vmatprep.subr.mxu0 0.0
        %501 = vmatpush1.msra.mxu0 %v462
        %502 = vmatprep.subr.mxu0 0.0
        %503 = vmatpush1.msra.mxu0 0.0
        %504 = vmatprep.subr.mxu0 0.0
        %505 = vmatpush1.msra.mxu0 0.0
        %506 = vmatprep.subr.mxu0 0.0
        %507 = vmatpush1.msra.mxu0 0.0
        %508 = vmatprep.subr.mxu0 0.0
        %509 = vmatpush1.msra.mxu0 0.0
        %510 = vmatprep.subr.mxu0 0.0
        %511 = vmatpush1.msra.mxu0 0.0
        %512 = vmatprep.subr.mxu0 0.0
        %513 = vmatpush1.msra.mxu0 0.0
        %514 = vmatprep.subr.mxu0 0.0
        %515 = vmatpush1.msra.mxu0 0.0
        %516 = vmatprep.subr.mxu0 0.0
        %517 = vmatpush1.msra.mxu0 0.0
        %518 = vmatprep.subr.mxu0 0.0
        %519 = vmatpush1.msra.mxu0 0.0
        %520 = vmatprep.subr.mxu0 0.0
        %521 = vmatpush1.msra.mxu0 0.0
        %522 = vmatprep.subr.mxu0 0.0
        %523 = vmatpush1.msra.mxu0 0.0
        %524 = vmatprep.subr.mxu0 0.0
        %525 = vmatpush1.msra.mxu0 0.0
        %526 = vmatprep.subr.mxu0 0.0
        %527 = vmatpush1.msra.mxu0 0.0
        %528 = vmatprep.subr.mxu0 0.0
        %529 = vmatpush1.msra.mxu0 0.0
        %530 = vmatprep.subr.mxu0 0.0
        %531 = vmatpush1.msra.mxu0 0.0
        %532 = vmatprep.subr.mxu0 0.0
        %533 = vmatpush1.msra.mxu0 0.0
        %534 = vmatprep.mubr.f32.mxu0 0.0
        %535 = vmatmul.mubr.f32.gmra.mrb[0].mxu0 %v440
        %v536 = vpop.f32.mrb[0].mxu0
        %v537 = vadd.f32 %v468, %v536
        %v538 = vpop.f32.mrb[0].mxu0
        %539 = vmatprep.mubr.f32.mxu0 0.0
        %540 = vmatmul.mubr.f32.gmra.mrb[0].mxu0 %v441
        %v541 = vpop.f32.mrb[0].mxu0
        %v542 = vadd.f32 %v468, %v541
        %v543 = vpop.f32.mrb[0].mxu0
        %544 = vmatprep.mubr.f32.mxu0 0.0
        %545 = vmatmul.mubr.f32.gmra.mrb[0].mxu0 %v442
        %v546 = vpop.f32.mrb[0].mxu0
        %v547 = vadd.f32 %v468, %v546
        %v548 = vpop.f32.mrb[0].mxu0
        %549 = vmatprep.mubr.f32.mxu0 0.0
        %550 = vmatmul.mubr.f32.gmra.mrb[0].mxu0 %v443
        %v551 = vpop.f32.mrb[0].mxu0
        %v552 = vadd.f32 %v468, %v551
        %v553 = vpop.f32.mrb[0].mxu0
        %554 = vmatprep.mubr.f32.mxu0 0.0
        %555 = vmatmul.mubr.f32.gmra.mrb[0].mxu0 %v444
        %v556 = vpop.f32.mrb[0].mxu0
        %v557 = vadd.f32 %v468, %v556
        %v558 = vpop.f32.mrb[0].mxu0
        %559 = vmatprep.mubr.f32.mxu0 0.0
        %560 = vmatmul.mubr.f32.gmra.mrb[0].mxu0 %v445
        %v561 = vpop.f32.mrb[0].mxu0
        %v562 = vadd.f32 %v468, %v561
        %v563 = vpop.f32.mrb[0].mxu0
        %564 = vmatprep.mubr.f32.mxu0 0.0
        %565 = vmatmul.mubr.f32.gmra.mrb[0].mxu0 %v446
        %v566 = vpop.f32.mrb[0].mxu0
        %v567 = vadd.f32 %v468, %v566
        %v568 = vpop.f32.mrb[0].mxu0
        %569 = vdwg.mxu0
        %v570 = vmax.f32 %v537, 0.0
        %v571 = vmax.f32 %v542, 0.0
        %v572 = vmax.f32 %v547, 0.0
        %v573 = vmax.f32 %v552, 0.0
        %v574 = vmax.f32 %v557, 0.0
        %v575 = vmax.f32 %v562, 0.0
        %v576 = vmax.f32 %v567, 0.0
        %v577 = vld [vmem:[%s5] sm:$0xff]
        %v578 = vld [vmem:[%s5 + $0x8] sm:$0xff]
        %v579 = vld [vmem:[%s5 + $0x10] sm:$0xff]
        %v580 = vld [vmem:[%s5 + $0x18] sm:$0xff]
        %v581 = vld [vmem:[%s5 + $0x20] sm:$0xff]
        %v582 = vld [vmem:[%s5 + $0x28] sm:$0xff]
        %v583 = vld [vmem:[%s5 + $0x30] sm:$0xff]
        %v584 = vld [vmem:[%s5 + $0x38] sm:$0xff]
        %v585 = vld [vmem:[%s5 + $0x40] sm:$0xff]
        %v586 = vld [vmem:[%s5 + $0x48] sm:$0xff]
        %v587 = vld [vmem:[%s5 + $0x50] sm:$0xff]
        %v588 = vld [vmem:[%s5 + $0x58] sm:$0xff]
        %v589 = vld [vmem:[%s5 + $0x60] sm:$0xff]
        %v590 = vld [vmem:[%s5 + $0x68] sm:$0xff]
        %v591 = vld [vmem:[%s5 + $0x70] sm:$0xff]
        %v592 = vld [vmem:[%s5 + $0x78] sm:$0xff]
        %v593 = vld [vmem:[%s6] sm:$0x1]
        %v595 = vlaneseq
        %v596 = vshrl.u32 %v595, 7
        %v597 = vsub.s32 0, %v596
        %v598 = vrot.slane %v593, %v597
        %600 = vmatprep.subr.mxu0 0.0
        %601 = vmatpush1.msra.mxu0 %v577
        %602 = vmatprep.subr.mxu0 0.0
        %603 = vmatpush1.msra.mxu0 %v578
        %604 = vmatprep.subr.mxu0 0.0
        %605 = vmatpush1.msra.mxu0 %v579
        %606 = vmatprep.subr.mxu0 0.0
        %607 = vmatpush1.msra.mxu0 %v580
        %608 = vmatprep.subr.mxu0 0.0
        %609 = vmatpush1.msra.mxu0 %v581
        %610 = vmatprep.subr.mxu0 0.0
        %611 = vmatpush1.msra.mxu0 %v582
        %612 = vmatprep.subr.mxu0 0.0
        %613 = vmatpush1.msra.mxu0 %v583
        %614 = vmatprep.subr.mxu0 0.0
        %615 = vmatpush1.msra.mxu0 %v584
        %616 = vmatprep.subr.mxu0 0.0
        %617 = vmatpush1.msra.mxu0 %v585
        %618 = vmatprep.subr.mxu0 0.0
        %619 = vmatpush1.msra.mxu0 %v586
        %620 = vmatprep.subr.mxu0 0.0
        %621 = vmatpush1.msra.mxu0 %v587
        %622 = vmatprep.subr.mxu0 0.0
        %623 = vmatpush1.msra.mxu0 %v588
        %624 = vmatprep.subr.mxu0 0.0
        %625 = vmatpush1.msra.mxu0 %v589
        %626 = vmatprep.subr.mxu0 0.0
        %627 = vmatpush1.msra.mxu0 %v590
        %628 = vmatprep.subr.mxu0 0.0
        %629 = vmatpush1.msra.mxu0 %v591
        %630 = vmatprep.subr.mxu0 0.0
        %631 = vmatpush1.msra.mxu0 %v592
        %632 = vmatprep.subr.mxu0 0.0
        %633 = vmatpush1.msra.mxu0 0.0
        %634 = vmatprep.subr.mxu0 0.0
        %635 = vmatpush1.msra.mxu0 0.0
        %636 = vmatprep.subr.mxu0 0.0
        %637 = vmatpush1.msra.mxu0 0.0
        %638 = vmatprep.subr.mxu0 0.0
        %639 = vmatpush1.msra.mxu0 0.0
        %640 = vmatprep.subr.mxu0 0.0
        %641 = vmatpush1.msra.mxu0 0.0
        %642 = vmatprep.subr.mxu0 0.0
        %643 = vmatpush1.msra.mxu0 0.0
        %644 = vmatprep.subr.mxu0 0.0
        %645 = vmatpush1.msra.mxu0 0.0
        %646 = vmatprep.subr.mxu0 0.0
        %647 = vmatpush1.msra.mxu0 0.0
        %648 = vmatprep.subr.mxu0 0.0
        %649 = vmatpush1.msra.mxu0 0.0
        %650 = vmatprep.subr.mxu0 0.0
        %651 = vmatpush1.msra.mxu0 0.0
        %652 = vmatprep.subr.mxu0 0.0
        %653 = vmatpush1.msra.mxu0 0.0
        %654 = vmatprep.subr.mxu0 0.0
        %655 = vmatpush1.msra.mxu0 0.0
        %656 = vmatprep.subr.mxu0 0.0
        %657 = vmatpush1.msra.mxu0 0.0
        %658 = vmatprep.subr.mxu0 0.0
        %659 = vmatpush1.msra.mxu0 0.0
        %660 = vmatprep.subr.mxu0 0.0
        %661 = vmatpush1.msra.mxu0 0.0
        %662 = vmatprep.subr.mxu0 0.0
        %663 = vmatpush1.msra.mxu0 0.0
        %664 = vmatprep.mubr.f32.mxu0 0.0
        %665 = vmatmul.mubr.f32.gmra.mrb[0].mxu0 %v570
        %v666 = vpop.f32.mrb[0].mxu0
        %v667 = vadd.f32 %v598, %v666
        %v668 = vpop.f32.mrb[0].mxu0
        %669 = vmatprep.mubr.f32.mxu0 0.0
        %670 = vmatmul.mubr.f32.gmra.mrb[0].mxu0 %v571
        %v671 = vpop.f32.mrb[0].mxu0
        %v672 = vadd.f32 %v598, %v671
        %v673 = vpop.f32.mrb[0].mxu0
        %674 = vmatprep.mubr.f32.mxu0 0.0
        %675 = vmatmul.mubr.f32.gmra.mrb[0].mxu0 %v572
        %v676 = vpop.f32.mrb[0].mxu0
        %v677 = vadd.f32 %v598, %v676
        %v678 = vpop.f32.mrb[0].mxu0
        %679 = vmatprep.mubr.f32.mxu0 0.0
        %680 = vmatmul.mubr.f32.gmra.mrb[0].mxu0 %v573
        %v681 = vpop.f32.mrb[0].mxu0
        %v682 = vadd.f32 %v598, %v681
        %v683 = vpop.f32.mrb[0].mxu0
        %684 = vmatprep.mubr.f32.mxu0 0.0
        %685 = vmatmul.mubr.f32.gmra.mrb[0].mxu0 %v574
        %v686 = vpop.f32.mrb[0].mxu0
        %v687 = vadd.f32 %v598, %v686
        %v688 = vpop.f32.mrb[0].mxu0
        %689 = vmatprep.mubr.f32.mxu0 0.0
        %690 = vmatmul.mubr.f32.gmra.mrb[0].mxu0 %v575
        %v691 = vpop.f32.mrb[0].mxu0
        %v692 = vadd.f32 %v598, %v691
        %v693 = vpop.f32.mrb[0].mxu0
        %694 = vmatprep.mubr.f32.mxu0 0.0
        %695 = vmatmul.mubr.f32.gmra.mrb[0].mxu0 %v576
        %v696 = vpop.f32.mrb[0].mxu0
        %v697 = vadd.f32 %v598, %v696
        %v698 = vpop.f32.mrb[0].mxu0
        %699 = vdwg.mxu0
        %vm700 = vcmask 343040
        %701 = vst.msk [vmem:[%s280] sm:$0xff] %vm700, %v667
        %702 = vst.msk [vmem:[%s280 + $0x8] sm:$0xff] %vm700, %v672
        %703 = vst.msk [vmem:[%s280 + $0x10] sm:$0xff] %vm700, %v677
        %704 = vst.msk [vmem:[%s280 + $0x18] sm:$0xff] %vm700, %v682
        %705 = vst.msk [vmem:[%s280 + $0x20] sm:$0xff] %vm700, %v687
        %706 = vst.msk [vmem:[%s280 + $0x28] sm:$0xff] %vm700, %v692
        %707 = vst.msk [vmem:[%s280 + $0x30] sm:$0xff] %vm700, %v697
        %s708 = sand.u32 %s178, 1
        %s709 = sand.u32 %s178, 1
        %s710 = smul.addr %s709, 56
        %s711 = scalar_lea.vmem [#allocation2], %s710
        // Predicated region
        $region49: #{tpu_custom_call.1} parent=47 // pred_check
          %p712 = pneg %p188
        $region50: #{tpu_custom_call.1} parent=47 // pred_check_branch
          %714 = sbr.rel (%p712) target = $region52
        $region51: #{tpu_custom_call.1} parent=47 // pred_region
          %s715 = smul.u32 7, %s18
          %s716 = ssub.s32 13, %s715
          %p717 = scmp.lt.s32.totalorder %s716, 7
          %s718 = scalar_select %p717, %s716, 7
          %s719 = smul.u32 128, %s718
          %p720 = scmp.ne.s32.totalorder 0, %s719
          %s721 = smul.addr %s715, 8
          %s722 = scalar_lea.vmem %s7, %s721
          // Predicated region
          $region53: #{tpu_custom_call.1} parent=51 // pred_check
            %p723 = pneg %p720
          $region54: #{tpu_custom_call.1} parent=51 // pred_check_branch
            %725 = sbr.rel (%p723) target = $region56
          $region55: #{tpu_custom_call.1} parent=51 // pred_region
            // Predicated region
            $region57: #{tpu_custom_call.1} parent=55 // pred_check
              _
            $region58: #{tpu_custom_call.1} parent=55 // pred_check_branch
              %727 = sbr.rel (0) target = $region60
            $region59: #{tpu_custom_call.1} parent=55 // pred_region
              // Predicated region
              $region79: #{tpu_custom_call.1} parent=59 // pred_check
                _
              $region80: #{tpu_custom_call.1} parent=59 // pred_check_branch
                %789 = sbr.rel (0) target = $region82
              $region81: #{tpu_custom_call.1} parent=59 // pred_region
                %s790 = sdiv.u32.pop %s718, 7
                %s791 = srem.u32.pop %s718, 7
                // While loop
                $region83: #{tpu_custom_call.1} parent=81 // loop_pre_header
                  _
                $region84: #{tpu_custom_call.1} parent=81 // loop_header
                  %s793 = sphi 0, %s795
                  %p794 = scmp.ge.s32.totalorder %s793, %s790
                  %s798 = sphi 0, %s817
                  %s799 = sphi %s711, %s820
                  %s800 = sphi %s722, %s821
                $region85: #{tpu_custom_call.1} parent=81 // loop_header_branch
                  %797 = sbr.rel (%p794) target = $region89
                $region86: #{tpu_custom_call.1} parent=81 // loop_body
                  %v801 = vld [vmem:[%s799] sm:$0xff]
                  %802 = vst [vmem:[%s800] sm:$0xff] %v801
                  %v803 = vld [vmem:[%s799 + $0x8] sm:$0xff]
                  %804 = vst [vmem:[%s800 + $0x8] sm:$0xff] %v803
                  %v805 = vld [vmem:[%s799 + $0x10] sm:$0xff]
                  %806 = vst [vmem:[%s800 + $0x10] sm:$0xff] %v805
                  %v807 = vld [vmem:[%s799 + $0x18] sm:$0xff]
                  %808 = vst [vmem:[%s800 + $0x18] sm:$0xff] %v807
                  %v809 = vld [vmem:[%s799 + $0x20] sm:$0xff]
                  %810 = vst [vmem:[%s800 + $0x20] sm:$0xff] %v809
                  %v811 = vld [vmem:[%s799 + $0x28] sm:$0xff]
                  %812 = vst [vmem:[%s800 + $0x28] sm:$0xff] %v811
                  %v813 = vld [vmem:[%s799 + $0x30] sm:$0xff]
                  %814 = vst [vmem:[%s800 + $0x30] sm:$0xff] %v813
                  %s815 = sadd.s32 1, %s798
                  %p816 = scmp.ge.s32.totalorder %s815, %s790
                  %s817 = scalar_select %p816, 0, %s815
                  %s818 = smul.u32 %s817, 56
                  %s819 = smul.u32 %s817, 56
                  %s820 = scalar_lea.vmem %s711, %s818 [#allocation2]
                  %s821 = scalar_lea.vmem %s722, %s819
                $region87: #{tpu_custom_call.1} parent=81 // loop_footer
                  %s795 = sadd.s32 %s793, 1
                $region88: #{tpu_custom_call.1} parent=81 // loop_footer_branch
                  %792 = sbr.rel target = $region84
                $region89: #{tpu_custom_call.1} parent=81 // loop_exit
                  _
                %s822 = sdiv.u32.pop %s718, 7
                %s823 = srem.u32.pop %s718, 7
                %s824 = smul.u32 %s822, 7
                %s825 = smul.u32 8, %s824
                %s826 = scalar_lea.vmem %s711, %s825 [#allocation2]
                %s827 = smul.u32 8, %s824
                %s828 = scalar_lea.vmem %s722, %s827
                // While loop
                $region90: #{tpu_custom_call.1} parent=81 // loop_pre_header
                  _
                $region91: #{tpu_custom_call.1} parent=81 // loop_header
                  %s830 = sphi 0, %s832
                  %p831 = scmp.ge.s32.totalorder %s830, %s823
                  %s835 = sphi 0, %s842
                  %s836 = sphi %s826, %s845
                  %s837 = sphi %s828, %s846
                $region92: #{tpu_custom_call.1} parent=81 // loop_header_branch
                  %834 = sbr.rel (%p831) target = $region96
                $region93: #{tpu_custom_call.1} parent=81 // loop_body
                  %v838 = vld [vmem:[%s836] sm:$0xff]
                  %839 = vst [vmem:[%s837] sm:$0xff] %v838
                  %s840 = sadd.s32 1, %s835
                  %p841 = scmp.ge.s32.totalorder %s840, %s823
                  %s842 = scalar_select %p841, 0, %s840
                  %s843 = smul.u32 %s842, 8
                  %s844 = smul.u32 %s842, 8
                  %s845 = scalar_lea.vmem %s826, %s843 [#allocation2]
                  %s846 = scalar_lea.vmem %s828, %s844
                $region94: #{tpu_custom_call.1} parent=81 // loop_footer
                  %s832 = sadd.s32 %s830, 1
                $region95: #{tpu_custom_call.1} parent=81 // loop_footer_branch
                  %829 = sbr.rel target = $region91
                $region96: #{tpu_custom_call.1} parent=81 // loop_exit
                  _
              $region82: #{tpu_custom_call.1} parent=59 // pred_fallthru
                _
              // Predicated region
              $region97: #{tpu_custom_call.1} parent=59 // pred_check
                _
              $region98: #{tpu_custom_call.1} parent=59 // pred_check_branch
                %848 = sbr.rel target = $region100
              $region99: #{tpu_custom_call.1} parent=59 // pred_region
                _
              $region100: #{tpu_custom_call.1} parent=59 // pred_fallthru
                _
            $region60: #{tpu_custom_call.1} parent=55 // pred_fallthru
              _
            // Predicated region
            $region61: #{tpu_custom_call.1} parent=55 // pred_check
              _
            $region62: #{tpu_custom_call.1} parent=55 // pred_check_branch
              %729 = sbr.rel target = $region64
            $region63: #{tpu_custom_call.1} parent=55 // pred_region
              %s731 = sdiv.u32.pop %s718, 7
              %s732 = srem.u32.pop %s718, 7
              // While loop
              $region65: #{tpu_custom_call.1} parent=63 // loop_pre_header
                _
              $region66: #{tpu_custom_call.1} parent=63 // loop_header
                %s734 = sphi 0, %s736
                %p735 = scmp.ge.s32.totalorder %s734, %s731
                %s739 = sphi 0, %s758
                %s740 = sphi %s711, %s761
                %s741 = sphi %s722, %s762
              $region67: #{tpu_custom_call.1} parent=63 // loop_header_branch
                %738 = sbr.rel (%p735) target = $region71
              $region68: #{tpu_custom_call.1} parent=63 // loop_body
                %v742 = vld [vmem:[%s740] sm:$0xff]
                %743 = vst [vmem:[%s741] sm:$0xff] %v742
                %v744 = vld [vmem:[%s740 + $0x8] sm:$0xff]
                %745 = vst [vmem:[%s741 + $0x8] sm:$0xff] %v744
                %v746 = vld [vmem:[%s740 + $0x10] sm:$0xff]
                %747 = vst [vmem:[%s741 + $0x10] sm:$0xff] %v746
                %v748 = vld [vmem:[%s740 + $0x18] sm:$0xff]
                %749 = vst [vmem:[%s741 + $0x18] sm:$0xff] %v748
                %v750 = vld [vmem:[%s740 + $0x20] sm:$0xff]
                %751 = vst [vmem:[%s741 + $0x20] sm:$0xff] %v750
                %v752 = vld [vmem:[%s740 + $0x28] sm:$0xff]
                %753 = vst [vmem:[%s741 + $0x28] sm:$0xff] %v752
                %v754 = vld [vmem:[%s740 + $0x30] sm:$0xff]
                %755 = vst [vmem:[%s741 + $0x30] sm:$0xff] %v754
                %s756 = sadd.s32 1, %s739
                %p757 = scmp.ge.s32.totalorder %s756, %s731
                %s758 = scalar_select %p757, 0, %s756
                %s759 = smul.u32 %s758, 56
                %s760 = smul.u32 %s758, 56
                %s761 = scalar_lea.vmem %s711, %s759 [#allocation2]
                %s762 = scalar_lea.vmem %s722, %s760
              $region69: #{tpu_custom_call.1} parent=63 // loop_footer
                %s736 = sadd.s32 %s734, 1
              $region70: #{tpu_custom_call.1} parent=63 // loop_footer_branch
                %733 = sbr.rel target = $region66
              $region71: #{tpu_custom_call.1} parent=63 // loop_exit
                _
              %s763 = sdiv.u32.pop %s718, 7
              %s764 = srem.u32.pop %s718, 7
              %s765 = smul.u32 %s763, 7
              %s766 = smul.u32 8, %s765
              %s767 = scalar_lea.vmem %s711, %s766 [#allocation2]
              %s768 = smul.u32 8, %s765
              %s769 = scalar_lea.vmem %s722, %s768
              // While loop
              $region72: #{tpu_custom_call.1} parent=63 // loop_pre_header
                _
              $region73: #{tpu_custom_call.1} parent=63 // loop_header
                %s771 = sphi 0, %s773
                %p772 = scmp.ge.s32.totalorder %s771, %s764
                %s776 = sphi 0, %s783
                %s777 = sphi %s767, %s786
                %s778 = sphi %s769, %s787
              $region74: #{tpu_custom_call.1} parent=63 // loop_header_branch
                %775 = sbr.rel (%p772) target = $region78
              $region75: #{tpu_custom_call.1} parent=63 // loop_body
                %v779 = vld [vmem:[%s777] sm:$0xff]
                %780 = vst [vmem:[%s778] sm:$0xff] %v779
                %s781 = sadd.s32 1, %s776
                %p782 = scmp.ge.s32.totalorder %s781, %s764
                %s783 = scalar_select %p782, 0, %s781
                %s784 = smul.u32 %s783, 8
                %s785 = smul.u32 %s783, 8
                %s786 = scalar_lea.vmem %s767, %s784 [#allocation2]
                %s787 = scalar_lea.vmem %s769, %s785
              $region76: #{tpu_custom_call.1} parent=63 // loop_footer
                %s773 = sadd.s32 %s771, 1
              $region77: #{tpu_custom_call.1} parent=63 // loop_footer_branch
                %770 = sbr.rel target = $region73
              $region78: #{tpu_custom_call.1} parent=63 // loop_exit
                _
            $region64: #{tpu_custom_call.1} parent=55 // pred_fallthru
              _
          $region56: #{tpu_custom_call.1} parent=51 // pred_fallthru
            _
          %849 = vnop
        $region52: #{tpu_custom_call.1} parent=47 // pred_fallthru
          _
      $region48: #{tpu_custom_call.1} parent=5 // pred_fallthru
        _
      %p850 = scmp.le.s32.totalorder 2, %s13
      // Predicated region
      $region101: #{tpu_custom_call.1} parent=5 // pred_check
        %p851 = pneg %p850
      $region102: #{tpu_custom_call.1} parent=5 // pred_check_branch
        %853 = sbr.rel (%p851) target = $region104
      $region103: #{tpu_custom_call.1} parent=5 // pred_region
        %s854 = ssub.s32 %s13, 2
        // Predicated region
        $region105: #{tpu_custom_call.1} parent=103 // pred_check
          %p855 = pneg %p194
        $region106: #{tpu_custom_call.1} parent=103 // pred_check_branch
          %857 = sbr.rel (%p855) target = $region108
        $region107: #{tpu_custom_call.1} parent=103 // pred_region
          %s858 = sand.u32 %s179, 1
          %s859 = sand.u32 %s179, 1
          %s860 = smul.addr %s859, 56
          %s861 = scalar_lea.vmem [#allocation2], %s860
        $region108: #{tpu_custom_call.1} parent=103 // pred_fallthru
          _
      $region104: #{tpu_custom_call.1} parent=5 // pred_fallthru
        _
    $region6: #{tpu_custom_call.1} parent=1 // loop_footer
      %s17 = sadd.s32 1, %s13
    $region7: #{tpu_custom_call.1} parent=1 // loop_footer_branch
      %12 = sbr.rel target = $region3
    $region8: #{tpu_custom_call.1} parent=1 // loop_exit
      _

</llo_original>
